<compile_context>
chip_gen: v6e
topology: v6e:2x2x1
jax: 0.10.0
libtpu: 0.0.40
codegen_flags: <defaults>
</compile_context>

<pallas_src>
import functools
import math

import jax
import jax.numpy as jnp
from jax import lax
from jax.experimental import pallas as pl
from jax.experimental.pallas import tpu as pltpu


H1 = 10
H2 = 5


def _round_up(x, m):
    return ((x + m - 1) // m) * m


# ---------------------------------------------------------------------------
# Kernel
# ---------------------------------------------------------------------------
def discriminator_kernel(x_ref, p_ref, o_ref, *, dim, h1, h2):
    """One batch tile.

    x_ref: (TB, dim)  natural (rows, features) layout, no HBM transpose.
    p_ref: (96, L)    all live weights/biases, one packed array.
    o_ref: (1, TB)    lane-dense output slab (batch on lanes).
    """
    x = x_ref[...]                                    # (TB, dim)

    # Packed parameters: one 16-row band per weight, biases in band 5 (one lane
    # column per layer).  All slices are static -> plain VMEM loads.
    w1 = p_ref[0:h1, :dim]                            # (10, dim)
    w2 = p_ref[16:16 + h1, :h1]                       # (10, 10)
    w3 = p_ref[32:32 + h2, :h1]                       # (5, 10)
    w4 = p_ref[48:48 + h2, :h2]                       # (5, 5)
    w5 = p_ref[64:65, :h2]                            # (1, 5)
    b1 = p_ref[80:80 + h1, 0:1]                       # (10, 1) -> lane broadcast
    b2 = p_ref[80:80 + h1, 1:2]                       # (10, 1)
    b3 = p_ref[80:80 + h2, 2:3]                       # (5, 1)
    b4 = p_ref[80:80 + h2, 3:4]                       # (5, 1)
    b5 = p_ref[80:81, 4:5]                            # (1, 1)

    # Layer 1: contract over `dim` with x kept in its natural layout; the
    # result is (h1, TB), i.e. batch-on-lanes for the rest of the kernel.
    h = lax.dot_general(w1, x, (((1,), (1,)), ((), ())),
                        preferred_element_type=jnp.float32)
    h = jnp.maximum(h + b1, 0.0)
    # Linear(10,10)+ReLU, Linear(10,5)+ReLU
    h = jnp.maximum(jnp.dot(w2, h, preferred_element_type=jnp.float32) + b2, 0.0)
    h = jnp.maximum(jnp.dot(w3, h, preferred_element_type=jnp.float32) + b3, 0.0)

    # Attention(5,5): softmax(dim=1) of a (batch, 1) score column is exactly
    # 1.0, so the weighted input equals h bit-exactly; the subsequent ReLU on
    # the already-non-negative h is also an identity.  Elided (zero numerical
    # change, verified against the full reference below).

    # Linear(5,5)+ReLU, Linear(5,1)+Sigmoid
    h = jnp.maximum(jnp.dot(w4, h, preferred_element_type=jnp.float32) + b4, 0.0)
    z = jnp.dot(w5, h, preferred_element_type=jnp.float32) + b5          # (1, TB)
    o_ref[...] = 1.0 / (1.0 + jnp.exp(-z))            # lane-dense sigmoid output


# ---------------------------------------------------------------------------
# Parameters (PyTorch-style init & layout: weight (out, in), bias (out,))
# ---------------------------------------------------------------------------
def init_params(key, dim, h1=H1, h2=H2):
    def linear(key, fan_in, fan_out, bias=True):
        k_w, k_b = jax.random.split(key)
        bound = 1.0 / math.sqrt(fan_in)
        w = jax.random.uniform(k_w, (fan_out, fan_in), jnp.float32, -bound, bound)
        if bias:
            b = jax.random.uniform(k_b, (fan_out,), jnp.float32, -bound, bound)
            return w, b
        return w, None

    keys = jax.random.split(key, 7)
    w1, b1 = linear(keys[0], dim, h1)
    w2, b2 = linear(keys[1], h1, h1)
    w3, b3 = linear(keys[2], h1, h2)
    wa, ba = linear(keys[3], h2, h2)             # Attention.attention_weights
    ws, _ = linear(keys[4], h2, 1, bias=False)   # Attention.attention_score (no bias)
    w4, b4 = linear(keys[5], h2, h2)
    w5, b5 = linear(keys[6], h2, 1)
    return [w1, b1, w2, b2, w3, b3, wa, ba, ws, w4, b4, w5, b5]


def pack_params(params, dim, h1=H1, h2=H2):
    """Pack all live weights/biases into one (96, L) f32 array for a single BlockSpec."""
    w1, b1, w2, b2, w3, b3, wa, ba, ws, w4, b4, w5, b5 = params
    del wa, ba, ws  # attention block is a bit-exact no-op (see kernel comment)
    L = _round_up(max(dim, h1, h2, 8), 128)
    p = jnp.zeros((96, L), jnp.float32)
    p = p.at[0:h1, :dim].set(w1)
    p = p.at[16:16 + h1, :h1].set(w2)
    p = p.at[32:32 + h2, :h1].set(w3)
    p = p.at[48:48 + h2, :h2].set(w4)
    p = p.at[64:65, :h2].set(w5)
    p = p.at[80:80 + h1, 0].set(b1)
    p = p.at[80:80 + h1, 1].set(b2)
    p = p.at[80:80 + h2, 2].set(b3)
    p = p.at[80:80 + h2, 3].set(b4)
    p = p.at[80:81, 4].set(b5)
    return p


# ---------------------------------------------------------------------------
# Tile sizing
# ---------------------------------------------------------------------------
def _pick_batch_tile(N, dim, h1, h2, batch_tile, vmem_budget_bytes=20 << 20):
    """Largest lane-tile that fits a conservative VMEM budget (safe on v7x's
    smaller VMEM as well as v5e/v6e)."""
    # Per-lane bytes: double-buffered x tile + activation intermediates (2x slack)
    # + double-buffered output tile.
    per_lane_bytes = 4 * (2 * dim + 2 * (2 * h1 + 2 * h2 + 1) + 2)
    tb_cap = max(128, (vmem_budget_bytes // per_lane_bytes) // 128 * 128)
    n_lanes = _round_up(max(N, 128), 128)
    tb = min(_round_up(batch_tile, 128), tb_cap, n_lanes)
    # Keep >= 2 grid tiles when the batch allows so v7x's second TensorCore
    # gets work ("parallel" grid axis), but never shrink below 2048 lanes.
    if pl.cdiv(N, tb) < 2 and tb >= 4096:
        tb = max(2048, _round_up((tb + 1) // 2, 128))
    return tb, per_lane_bytes


# ---------------------------------------------------------------------------
# Wrapper
# ---------------------------------------------------------------------------
def discriminator_forward(x, packed, *, h1=H1, h2=H2, batch_tile=8192):
    N, dim = x.shape
    tb, per_lane_bytes = _pick_batch_tile(N, dim, h1, h2, batch_tile)
    n_tiles = pl.cdiv(N, tb)

    kernel = functools.partial(discriminator_kernel, dim=dim, h1=h1, h2=h2)

    flops = 2 * N * (dim * h1 + h1 * h1 + h1 * h2 + h2 * h2 + h2)
    cost = pl.CostEstimate(
        flops=int(flops),
        transcendentals=int(N),                       # one sigmoid per row
        bytes_accessed=int(N * dim * 4 + n_tiles * tb * 4 + packed.size * 4),
    )

    est_vmem = per_lane_bytes * tb + 2 * packed.size * 4
    vmem_limit = int(min(max(2 * est_vmem, 16 << 20), 32 << 20))

    out = pl.pallas_call(
        kernel,
        out_shape=jax.ShapeDtypeStruct((1, n_tiles * tb), jnp.float32),
        grid=(n_tiles,),
        in_specs=[
            # Natural-layout row tile of x; last block may be partial (ragged
            # batch) — garbage tail lanes are independent and sliced away.
            pl.BlockSpec((tb, dim), lambda i: (i, 0)),
            # Whole packed parameter array, constant across the grid.
            pl.BlockSpec(packed.shape, lambda i: (0, 0)),
        ],
        out_specs=pl.BlockSpec((1, tb), lambda i: (0, i)),  # lane-dense output
        compiler_params=pltpu.CompilerParams(
            dimension_semantics=("parallel",),
            vmem_limit_bytes=vmem_limit),
        cost_estimate=cost,
    )(x, packed)

    return out[0, :N].reshape(N, 1)


# ---------------------------------------------------------------------------
# Pure-JAX reference (keeps the full attention block) for correctness check
# ---------------------------------------------------------------------------
def discriminator_ref(x, params):
    w1, b1, w2, b2, w3, b3, wa, ba, ws, w4, b4, w5, b5 = params
    h = jax.nn.relu(x @ w1.T + b1)
    h = jax.nn.relu(h @ w2.T + b2)
    h = jax.nn.relu(h @ w3.T + b3)
    aw = jnp.tanh(h @ wa.T + ba)
    score = aw @ ws.T                        # (N, 1)
    attn = jax.nn.softmax(score, axis=1)     # softmax over a single column -> 1.0
    h = h * attn
    h = jax.nn.relu(h)
    h = jax.nn.relu(h @ w4.T + b4)
    return jax.nn.sigmoid(h @ w5.T + b5)


if __name__ == "__main__":
    key = jax.random.PRNGKey(0)
    k_x, k_p, k_x2 = jax.random.split(key, 3)

    # Small demo: ragged batch, single (partial) tile.
    N, dim = 500, 32
    x = jax.random.normal(k_x, (N, dim), jnp.float32)

    params = init_params(k_p, dim)
    packed = pack_params(params, dim)

    out = jax.block_until_ready(discriminator_forward(x, packed))
    ref = discriminator_ref(x, params)
    assert out.shape == (N, 1)
    max_diff = float(jnp.max(jnp.abs(out - ref)))
    assert jnp.allclose(out, ref, atol=1e-4, rtol=1e-4), (
        f"mismatch vs JAX reference, max|diff|={max_diff}")

    # Multi-tile + ragged-last-tile path (grid of 2, partial second block).
    N2 = 2000
    x2 = jax.random.normal(k_x2, (N2, dim), jnp.float32)
    out2 = jax.block_until_ready(discriminator_forward(x2, packed, batch_tile=1024))
    ref2 = discriminator_ref(x2, params)
    assert out2.shape == (N2, 1)
    max_diff2 = float(jnp.max(jnp.abs(out2 - ref2)))
    assert jnp.allclose(out2, ref2, atol=1e-4, rtol=1e-4), (
        f"mismatch vs JAX reference (multi-tile), max|diff|={max_diff2}")

    print("KERNEL_OK")
</pallas_src>

<mosaic_0001>
module attributes {stable_mosaic.version = 11 : i64} {
  func.func @discriminator_kernel(%arg0: i32, %arg1: memref<512x32xf32, #tpu.memory_space<vmem>>, %arg2: memref<96x128xf32, #tpu.memory_space<vmem>>, %arg3: memref<1x512xf32, #tpu.memory_space<vmem>>) attributes {dimension_semantics = [#tpu.dimension_semantics<parallel>], iteration_bounds = array<i64: 1>, scalar_prefetch = 0 : i64, scratch_operands = 0 : i64, tpu.core_type = #tpu.core_type<tc>, window_params = [{transform_indices = @transform_0, window_bounds = array<i64: 512, 32>}, {pipeline_mode = #tpu.pipeline_mode<synchronous>, transform_indices = @transform_1, window_bounds = array<i64: 96, 128>}, {transform_indices = @transform_2, window_bounds = array<i64: 1, 512>}]} {
    %c0 = arith.constant 0 : index
    %c0_0 = arith.constant 0 : index
    %0 = vector.load %arg1[%c0, %c0_0] : memref<512x32xf32, #tpu.memory_space<vmem>>, vector<512x32xf32>
    %c0_1 = arith.constant 0 : index
    %c0_2 = arith.constant 0 : index
    %1 = vector.load %arg2[%c0_1, %c0_2] : memref<96x128xf32, #tpu.memory_space<vmem>>, vector<10x32xf32>
    %c16 = arith.constant 16 : index
    %c0_3 = arith.constant 0 : index
    %2 = vector.load %arg2[%c16, %c0_3] : memref<96x128xf32, #tpu.memory_space<vmem>>, vector<10x10xf32>
    %c32 = arith.constant 32 : index
    %c0_4 = arith.constant 0 : index
    %3 = vector.load %arg2[%c32, %c0_4] : memref<96x128xf32, #tpu.memory_space<vmem>>, vector<5x10xf32>
    %c48 = arith.constant 48 : index
    %c0_5 = arith.constant 0 : index
    %4 = vector.load %arg2[%c48, %c0_5] : memref<96x128xf32, #tpu.memory_space<vmem>>, vector<5x5xf32>
    %c64 = arith.constant 64 : index
    %c0_6 = arith.constant 0 : index
    %5 = vector.load %arg2[%c64, %c0_6] : memref<96x128xf32, #tpu.memory_space<vmem>>, vector<1x5xf32>
    %c80 = arith.constant 80 : index
    %c0_7 = arith.constant 0 : index
    %6 = vector.load %arg2[%c80, %c0_7] : memref<96x128xf32, #tpu.memory_space<vmem>>, vector<10x1xf32>
    %c80_8 = arith.constant 80 : index
    %c1 = arith.constant 1 : index
    %7 = vector.load %arg2[%c80_8, %c1] : memref<96x128xf32, #tpu.memory_space<vmem>>, vector<10x1xf32>
    %c80_9 = arith.constant 80 : index
    %c2 = arith.constant 2 : index
    %8 = vector.load %arg2[%c80_9, %c2] : memref<96x128xf32, #tpu.memory_space<vmem>>, vector<5x1xf32>
    %c80_10 = arith.constant 80 : index
    %c3 = arith.constant 3 : index
    %9 = vector.load %arg2[%c80_10, %c3] : memref<96x128xf32, #tpu.memory_space<vmem>>, vector<5x1xf32>
    %c80_11 = arith.constant 80 : index
    %c4 = arith.constant 4 : index
    %10 = vector.load %arg2[%c80_11, %c4] : memref<96x128xf32, #tpu.memory_space<vmem>>, vector<1x1xf32>
    %cst = arith.constant dense<0.000000e+00> : vector<10x512xf32>
    %11 = tpu.matmul %1, %0, %cst {dimension_numbers = #tpu.dot_dimension_numbers<[1], [1], [0], [0], [0, 0, 1, 0], [], []>} : vector<10x32xf32>, vector<512x32xf32>, vector<10x512xf32> -> vector<10x512xf32>
    %12 = vector.broadcast %6 : vector<10x1xf32> to vector<10x512xf32>
    %13 = arith.addf %11, %12 : vector<10x512xf32>
    %cst_12 = arith.constant 0.000000e+00 : f32
    %14 = vector.broadcast %cst_12 : f32 to vector<10x512xf32>
    %15 = arith.maximumf %13, %14 : vector<10x512xf32>
    %cst_13 = arith.constant dense<0.000000e+00> : vector<10x512xf32>
    %16 = tpu.matmul %2, %15, %cst_13 {dimension_numbers = #tpu.dot_dimension_numbers<[1], [0], [0], [1], [0, 0, 1, 1], [], []>} : vector<10x10xf32>, vector<10x512xf32>, vector<10x512xf32> -> vector<10x512xf32>
    %17 = vector.broadcast %7 : vector<10x1xf32> to vector<10x512xf32>
    %18 = arith.addf %16, %17 : vector<10x512xf32>
    %cst_14 = arith.constant 0.000000e+00 : f32
    %19 = vector.broadcast %cst_14 : f32 to vector<10x512xf32>
    %20 = arith.maximumf %18, %19 : vector<10x512xf32>
    %cst_15 = arith.constant dense<0.000000e+00> : vector<5x512xf32>
    %21 = tpu.matmul %3, %20, %cst_15 {dimension_numbers = #tpu.dot_dimension_numbers<[1], [0], [0], [1], [0, 0, 1, 1], [], []>} : vector<5x10xf32>, vector<10x512xf32>, vector<5x512xf32> -> vector<5x512xf32>
    %22 = vector.broadcast %8 : vector<5x1xf32> to vector<5x512xf32>
    %23 = arith.addf %21, %22 : vector<5x512xf32>
    %cst_16 = arith.constant 0.000000e+00 : f32
    %24 = vector.broadcast %cst_16 : f32 to vector<5x512xf32>
    %25 = arith.maximumf %23, %24 : vector<5x512xf32>
    %cst_17 = arith.constant dense<0.000000e+00> : vector<5x512xf32>
    %26 = tpu.matmul %4, %25, %cst_17 {dimension_numbers = #tpu.dot_dimension_numbers<[1], [0], [0], [1], [0, 0, 1, 1], [], []>} : vector<5x5xf32>, vector<5x512xf32>, vector<5x512xf32> -> vector<5x512xf32>
    %27 = vector.broadcast %9 : vector<5x1xf32> to vector<5x512xf32>
    %28 = arith.addf %26, %27 : vector<5x512xf32>
    %cst_18 = arith.constant 0.000000e+00 : f32
    %29 = vector.broadcast %cst_18 : f32 to vector<5x512xf32>
    %30 = arith.maximumf %28, %29 : vector<5x512xf32>
    %cst_19 = arith.constant dense<0.000000e+00> : vector<1x512xf32>
    %31 = tpu.matmul %5, %30, %cst_19 {dimension_numbers = #tpu.dot_dimension_numbers<[1], [0], [0], [1], [0, 0, 1, 1], [], []>} : vector<1x5xf32>, vector<5x512xf32>, vector<1x512xf32> -> vector<1x512xf32>
    %32 = vector.broadcast %10 : vector<1x1xf32> to vector<1x512xf32>
    %33 = arith.addf %31, %32 : vector<1x512xf32>
    %cst_20 = arith.constant 0.000000e+00 : f32
    %34 = vector.broadcast %cst_20 : f32 to vector<1x512xf32>
    %35 = arith.subf %34, %33 : vector<1x512xf32>
    %36 = math.exp %35 : vector<1x512xf32>
    %cst_21 = arith.constant 1.000000e+00 : f32
    %37 = vector.broadcast %cst_21 : f32 to vector<1x512xf32>
    %38 = arith.addf %37, %36 : vector<1x512xf32>
    %cst_22 = arith.constant 1.000000e+00 : f32
    %39 = vector.broadcast %cst_22 : f32 to vector<1x512xf32>
    %40 = arith.divf %39, %38 : vector<1x512xf32>
    %c0_23 = arith.constant 0 : index
    %c0_24 = arith.constant 0 : index
    %41 = vector.load %arg3[%c0_23, %c0_24] : memref<1x512xf32, #tpu.memory_space<vmem>>, vector<1x512xf32>
    tpu.vector_store %arg3[%c0_23, %c0_24], %40 {strides = array<i32>} : memref<1x512xf32, #tpu.memory_space<vmem>>, vector<1x512xf32>,
    return
  }
  func.func @transform_0(%arg0: i32) -> (i32, i32) {
    %c0_i32 = arith.constant 0 : i32
    %c0_i32_0 = arith.constant 0 : i32
    return %arg0, %c0_i32 : i32, i32
  }
  func.func @transform_1(%arg0: i32) -> (i32, i32) {
    %c0_i32 = arith.constant 0 : i32
    %c0_i32_0 = arith.constant 0 : i32
    %c0_i32_1 = arith.constant 0 : i32
    return %c0_i32, %c0_i32_0 : i32, i32
  }
  func.func @transform_2(%arg0: i32) -> (i32, i32) {
    %c0_i32 = arith.constant 0 : i32
    %c0_i32_0 = arith.constant 0 : i32
    return %c0_i32, %arg0 : i32, i32
  }
}

</mosaic_0001>

<llo_original>
// kernel: tpu_custom_call.1
$region0: #{tpu_custom_call.1}
  #allocation0 [shape = 'u32[]', space=smem, size = 0x4, offset = 0x4, fixed_abs, tag = 'smem constant byte address 0x4 - core index']
  #allocation1 [shape = 'u32[144,128]{1,0:T(1,128)}', space=vmem, size = 0x12000, scoped, tag = 'internal scratch']
  %s0 = inlined_call_operand.vmem [shape: f32[500,32], index: 0, kind: input, shape index: {}]
  %s1 = inlined_call_operand.vmem [shape: f32[96,128], index: 1, kind: input, shape index: {}]
  %s2 = inlined_call_operand.hbm [shape: f32[1,512], index: 2, kind: output, shape index: {}]
  %s3 = sld [smem:[#allocation0]]
  $region18: #{tpu_custom_call.1} parent=0
    _
  %s5 = ssub.s32 1, %s3
  %s6 = scalar_select 0, %s5, %s3
  $region1: #{tpu_custom_call.1} parent=0
    #allocation2 [shape = 'u8[2048]{0}', space=vmem, size = 0x800, scoped, tag = 'output window, operand 0, single buffered']
    #allocation3 [shape = 's32[1]{0}', space=sflag, size = 0x4, scoped, tag = 'scoped memory for tpu_custom_call.1']
    %7 = vsyncpa [#allocation3], 0
    // Predicated region
    $region2: #{tpu_custom_call.1} parent=1 // pred_check
      _
    $region3: #{tpu_custom_call.1} parent=1 // pred_check_branch
      %9 = sbr.rel (0) target = $region5
    $region4: #{tpu_custom_call.1} parent=1 // pred_region
      _
    $region5: #{tpu_custom_call.1} parent=1 // pred_fallthru
      _
    // Predicated region
    $region6: #{tpu_custom_call.1} parent=1 // pred_check
      _
    $region7: #{tpu_custom_call.1} parent=1 // pred_check_branch
      %11 = sbr.rel (0) target = $region9
    $region8: #{tpu_custom_call.1} parent=1 // pred_region
      _
    $region9: #{tpu_custom_call.1} parent=1 // pred_fallthru
      _
    %v12 = vld [vmem:[%s0] sm:$0xff]
    %v13 = vld [vmem:[%s0 + $0x8] sm:$0xff]
    %v14 = vld [vmem:[%s0 + $0x10] sm:$0xff]
    %v15 = vld [vmem:[%s0 + $0x18] sm:$0xff]
    %v16 = vld [vmem:[%s0 + $0x20] sm:$0xff]
    %v17 = vld [vmem:[%s0 + $0x28] sm:$0xff]
    %v18 = vld [vmem:[%s0 + $0x30] sm:$0xff]
    %v19 = vld [vmem:[%s0 + $0x38] sm:$0xff]
    %v20 = vld [vmem:[%s0 + $0x40] sm:$0xff]
    %v21 = vld [vmem:[%s0 + $0x48] sm:$0xff]
    %v22 = vld [vmem:[%s0 + $0x50] sm:$0xff]
    %v23 = vld [vmem:[%s0 + $0x58] sm:$0xff]
    %v24 = vld [vmem:[%s0 + $0x60] sm:$0xff]
    %v25 = vld [vmem:[%s0 + $0x68] sm:$0xff]
    %v26 = vld [vmem:[%s0 + $0x70] sm:$0xff]
    %v27 = vld [vmem:[%s0 + $0x78] sm:$0xff]
    %v28 = vld [vmem:[%s0 + $0x80] sm:$0xff]
    %v29 = vld [vmem:[%s0 + $0x88] sm:$0xff]
    %v30 = vld [vmem:[%s0 + $0x90] sm:$0xff]
    %v31 = vld [vmem:[%s0 + $0x98] sm:$0xff]
    %v32 = vld [vmem:[%s0 + $0xa0] sm:$0xff]
    %v33 = vld [vmem:[%s0 + $0xa8] sm:$0xff]
    %v34 = vld [vmem:[%s0 + $0xb0] sm:$0xff]
    %v35 = vld [vmem:[%s0 + $0xb8] sm:$0xff]
    %v36 = vld [vmem:[%s0 + $0xc0] sm:$0xff]
    %v37 = vld [vmem:[%s0 + $0xc8] sm:$0xff]
    %v38 = vld [vmem:[%s0 + $0xd0] sm:$0xff]
    %v39 = vld [vmem:[%s0 + $0xd8] sm:$0xff]
    %v40 = vld [vmem:[%s0 + $0xe0] sm:$0xff]
    %v41 = vld [vmem:[%s0 + $0xe8] sm:$0xff]
    %v42 = vld [vmem:[%s0 + $0xf0] sm:$0xff]
    %v43 = vld [vmem:[%s0 + $0xf8] sm:$0xff]
    %v44 = vld [vmem:[%s0 + $0x100] sm:$0xff]
    %v45 = vld [vmem:[%s0 + $0x108] sm:$0xff]
    %v46 = vld [vmem:[%s0 + $0x110] sm:$0xff]
    %v47 = vld [vmem:[%s0 + $0x118] sm:$0xff]
    %v48 = vld [vmem:[%s0 + $0x120] sm:$0xff]
    %v49 = vld [vmem:[%s0 + $0x128] sm:$0xff]
    %v50 = vld [vmem:[%s0 + $0x130] sm:$0xff]
    %v51 = vld [vmem:[%s0 + $0x138] sm:$0xff]
    %v52 = vld [vmem:[%s0 + $0x140] sm:$0xff]
    %v53 = vld [vmem:[%s0 + $0x148] sm:$0xff]
    %v54 = vld [vmem:[%s0 + $0x150] sm:$0xff]
    %v55 = vld [vmem:[%s0 + $0x158] sm:$0xff]
    %v56 = vld [vmem:[%s0 + $0x160] sm:$0xff]
    %v57 = vld [vmem:[%s0 + $0x168] sm:$0xff]
    %v58 = vld [vmem:[%s0 + $0x170] sm:$0xff]
    %v59 = vld [vmem:[%s0 + $0x178] sm:$0xff]
    %v60 = vld [vmem:[%s0 + $0x180] sm:$0xff]
    %v61 = vld [vmem:[%s0 + $0x188] sm:$0xff]
    %v62 = vld [vmem:[%s0 + $0x190] sm:$0xff]
    %v63 = vld [vmem:[%s0 + $0x198] sm:$0xff]
    %v64 = vld [vmem:[%s0 + $0x1a0] sm:$0xff]
    %v65 = vld [vmem:[%s0 + $0x1a8] sm:$0xff]
    %v66 = vld [vmem:[%s0 + $0x1b0] sm:$0xff]
    %v67 = vld [vmem:[%s0 + $0x1b8] sm:$0xff]
    %v68 = vld [vmem:[%s0 + $0x1c0] sm:$0xff]
    %v69 = vld [vmem:[%s0 + $0x1c8] sm:$0xff]
    %v70 = vld [vmem:[%s0 + $0x1d0] sm:$0xff]
    %v71 = vld [vmem:[%s0 + $0x1d8] sm:$0xff]
    %v72 = vld [vmem:[%s0 + $0x1e0] sm:$0xff]
    %v73 = vld [vmem:[%s0 + $0x1e8] sm:$0xff]
    %v74 = vld [vmem:[%s0 + $0x1f0] sm:$0xff]
    %v75 = vld [vmem:[%s0 + $0x1f8] sm:$0xff]
    %v76 = vld [vmem:[%s1] sm:$0xff]
    %v77 = vld [vmem:[%s1 + $0x8] sm:$0x3]
    %v78 = vld [vmem:[%s1 + $0x10] sm:$0xff]
    %v79 = vld [vmem:[%s1 + $0x18] sm:$0x3]
    %v80 = vld [vmem:[%s1 + $0x20] sm:$0x1f]
    %v81 = vld [vmem:[%s1 + $0x30] sm:$0x1f]
    %v82 = vld [vmem:[%s1 + $0x40] sm:$0x1]
    %v83 = vld [vmem:[%s1 + $0x50] sm:$0xff]
    %v84 = vld [vmem:[%s1 + $0x58] sm:$0x3]
    %v85 = vld [vmem:[%s1 + $0x50] sm:$0x1f]
    %v86 = vld [vmem:[%s1 + $0x50] sm:$0x1]
    %88 = vset.pattern.permute.xlu0 0
    %89 = vperm.xlu0 %88, %v83
    %v90 = vpop.permute.xlu0 %89
    %93 = vset.pattern.permute.xlu0 0
    %94 = vperm.xlu0 %93, %v84
    %v95 = vpop.permute.xlu0 %94
    %vm97 = vcmask 261120
    %v99 = vsel %vm97, %v76, 0
    %v102 = vsel %vm97, %v77, 0
    %v105 = vsel %vm97, %v12, 0
    %v108 = vsel %vm97, %v13, 0
    %v111 = vsel %vm97, %v14, 0
    %v114 = vsel %vm97, %v15, 0
    %v117 = vsel %vm97, %v16, 0
    %v120 = vsel %vm97, %v17, 0
    %v123 = vsel %vm97, %v18, 0
    %v126 = vsel %vm97, %v19, 0
    %v129 = vsel %vm97, %v20, 0
    %v132 = vsel %vm97, %v21, 0
    %v135 = vsel %vm97, %v22, 0
    %v138 = vsel %vm97, %v23, 0
    %v141 = vsel %vm97, %v24, 0
    %v144 = vsel %vm97, %v25, 0
    %v147 = vsel %vm97, %v26, 0
    %v150 = vsel %vm97, %v27, 0
    %v153 = vsel %vm97, %v28, 0
    %v156 = vsel %vm97, %v29, 0
    %v159 = vsel %vm97, %v30, 0
    %v162 = vsel %vm97, %v31, 0
    %v165 = vsel %vm97, %v32, 0
    %v168 = vsel %vm97, %v33, 0
    %v171 = vsel %vm97, %v34, 0
    %v174 = vsel %vm97, %v35, 0
    %v177 = vsel %vm97, %v36, 0
    %v180 = vsel %vm97, %v37, 0
    %v183 = vsel %vm97, %v38, 0
    %v186 = vsel %vm97, %v39, 0
    %v189 = vsel %vm97, %v40, 0
    %v192 = vsel %vm97, %v41, 0
    %v195 = vsel %vm97, %v42, 0
    %v198 = vsel %vm97, %v43, 0
    %v201 = vsel %vm97, %v44, 0
    %v204 = vsel %vm97, %v45, 0
    %v207 = vsel %vm97, %v46, 0
    %v210 = vsel %vm97, %v47, 0
    %v213 = vsel %vm97, %v48, 0
    %v216 = vsel %vm97, %v49, 0
    %v219 = vsel %vm97, %v50, 0
    %v222 = vsel %vm97, %v51, 0
    %v225 = vsel %vm97, %v52, 0
    %v228 = vsel %vm97, %v53, 0
    %v231 = vsel %vm97, %v54, 0
    %v234 = vsel %vm97, %v55, 0
    %v237 = vsel %vm97, %v56, 0
    %v240 = vsel %vm97, %v57, 0
    %v243 = vsel %vm97, %v58, 0
    %v246 = vsel %vm97, %v59, 0
    %v249 = vsel %vm97, %v60, 0
    %v252 = vsel %vm97, %v61, 0
    %v255 = vsel %vm97, %v62, 0
    %v258 = vsel %vm97, %v63, 0
    %v261 = vsel %vm97, %v64, 0
    %v264 = vsel %vm97, %v65, 0
    %v267 = vsel %vm97, %v66, 0
    %v270 = vsel %vm97, %v67, 0
    %v273 = vsel %vm97, %v68, 0
    %v276 = vsel %vm97, %v69, 0
    %v279 = vsel %vm97, %v70, 0
    %v282 = vsel %vm97, %v71, 0
    %v285 = vsel %vm97, %v72, 0
    %v288 = vsel %vm97, %v73, 0
    %v291 = vsel %vm97, %v74, 0
    %v294 = vsel %vm97, %v75, 0
    %296 = vmatprep.subr.mxu0 0.0
    %297 = vmatpush1.xpose.msra.mxu0 %v150
    %298 = vmatprep.subr.mxu0 0.0
    %299 = vmatpush1.xpose.msra.mxu0 %v147
    %300 = vmatprep.subr.mxu0 0.0
    %301 = vmatpush1.xpose.msra.mxu0 %v144
    %302 = vmatprep.subr.mxu0 0.0
    %303 = vmatpush1.xpose.msra.mxu0 %v141
    %304 = vmatprep.subr.mxu0 0.0
    %305 = vmatpush1.xpose.msra.mxu0 %v138
    %306 = vmatprep.subr.mxu0 0.0
    %307 = vmatpush1.xpose.msra.mxu0 %v135
    %308 = vmatprep.subr.mxu0 0.0
    %309 = vmatpush1.xpose.msra.mxu0 %v132
    %310 = vmatprep.subr.mxu0 0.0
    %311 = vmatpush1.xpose.msra.mxu0 %v129
    %312 = vmatprep.subr.mxu0 0.0
    %313 = vmatpush1.xpose.msra.mxu0 %v126
    %314 = vmatprep.subr.mxu0 0.0
    %315 = vmatpush1.xpose.msra.mxu0 %v123
    %316 = vmatprep.subr.mxu0 0.0
    %317 = vmatpush1.xpose.msra.mxu0 %v120
    %318 = vmatprep.subr.mxu0 0.0
    %319 = vmatpush1.xpose.msra.mxu0 %v117
    %320 = vmatprep.subr.mxu0 0.0
    %321 = vmatpush1.xpose.msra.mxu0 %v114
    %322 = vmatprep.subr.mxu0 0.0
    %323 = vmatpush1.xpose.msra.mxu0 %v111
    %324 = vmatprep.subr.mxu0 0.0
    %325 = vmatpush1.xpose.msra.mxu0 %v108
    %326 = vmatprep.subr.mxu0 0.0
    %327 = vmatpush1.xpose.msra.mxu0 %v105
    %328 = vmatprep.subr.mxu0 0.0
    %329 = vmatpush2.xpose.msra.mxu0 %v198
    %330 = vmatprep.subr.mxu0 0.0
    %331 = vmatpush2.xpose.msra.mxu0 %v195
    %332 = vmatprep.subr.mxu0 0.0
    %333 = vmatpush2.xpose.msra.mxu0 %v192
    %334 = vmatprep.subr.mxu0 0.0
    %335 = vmatpush2.xpose.msra.mxu0 %v189
    %336 = vmatprep.subr.mxu0 0.0
    %337 = vmatpush2.xpose.msra.mxu0 %v186
    %338 = vmatprep.subr.mxu0 0.0
    %339 = vmatpush2.xpose.msra.mxu0 %v183
    %340 = vmatprep.subr.mxu0 0.0
    %341 = vmatpush2.xpose.msra.mxu0 %v180
    %342 = vmatprep.subr.mxu0 0.0
    %343 = vmatpush2.xpose.msra.mxu0 %v177
    %344 = vmatprep.subr.mxu0 0.0
    %345 = vmatpush2.xpose.msra.mxu0 %v174
    %346 = vmatprep.subr.mxu0 0.0
    %347 = vmatpush2.xpose.msra.mxu0 %v171
    %348 = vmatprep.subr.mxu0 0.0
    %349 = vmatpush2.xpose.msra.mxu0 %v168
    %350 = vmatprep.subr.mxu0 0.0
    %351 = vmatpush2.xpose.msra.mxu0 %v165
    %352 = vmatprep.subr.mxu0 0.0
    %353 = vmatpush2.xpose.msra.mxu0 %v162
    %354 = vmatprep.subr.mxu0 0.0
    %355 = vmatpush2.xpose.msra.mxu0 %v159
    %356 = vmatprep.subr.mxu0 0.0
    %357 = vmatpush2.xpose.msra.mxu0 %v156
    %358 = vmatprep.subr.mxu0 0.0
    %359 = vmatpush2.xpose.msra.mxu0 %v153
    %360 = vmatprep.mubr.f32.mxu0 0.0
    %361 = vmatmul.mubr.f32.gmra.mxu0 %v99
    %v362 = vpop.f32.mrf.mxu0
    %v363 = vadd.f32 %v90, %v362
    %v364 = vpop.f32.mrf.mxu0
    %v365 = vadd.f32 %v90, %v364
    %366 = vmatprep.mubr.f32.mxu0 0.0
    %367 = vmatmul.mubr.f32.gmra.mxu0 %v102
    %v368 = vpop.f32.mrf.mxu0
    %v369 = vadd.f32 %v95, %v368
    %v370 = vpop.f32.mrf.mxu0
    %v371 = vadd.f32 %v95, %v370
    %372 = vdwg.mxu0
    %373 = vmatprep.subr.mxu0 0.0
    %374 = vmatpush1.xpose.msra.mxu0 %v246
    %375 = vmatprep.subr.mxu0 0.0
    %376 = vmatpush1.xpose.msra.mxu0 %v243
    %377 = vmatprep.subr.mxu0 0.0
    %378 = vmatpush1.xpose.msra.mxu0 %v240
    %379 = vmatprep.subr.mxu0 0.0
    %380 = vmatpush1.xpose.msra.mxu0 %v237
    %381 = vmatprep.subr.mxu0 0.0
    %382 = vmatpush1.xpose.msra.mxu0 %v234
    %383 = vmatprep.subr.mxu0 0.0
    %384 = vmatpush1.xpose.msra.mxu0 %v231
    %385 = vmatprep.subr.mxu0 0.0
    %386 = vmatpush1.xpose.msra.mxu0 %v228
    %387 = vmatprep.subr.mxu0 0.0
    %388 = vmatpush1.xpose.msra.mxu0 %v225
    %389 = vmatprep.subr.mxu0 0.0
    %390 = vmatpush1.xpose.msra.mxu0 %v222
    %391 = vmatprep.subr.mxu0 0.0
    %392 = vmatpush1.xpose.msra.mxu0 %v219
    %393 = vmatprep.subr.mxu0 0.0
    %394 = vmatpush1.xpose.msra.mxu0 %v216
    %395 = vmatprep.subr.mxu0 0.0
    %396 = vmatpush1.xpose.msra.mxu0 %v213
    %397 = vmatprep.subr.mxu0 0.0
    %398 = vmatpush1.xpose.msra.mxu0 %v210
    %399 = vmatprep.subr.mxu0 0.0
    %400 = vmatpush1.xpose.msra.mxu0 %v207
    %401 = vmatprep.subr.mxu0 0.0
    %402 = vmatpush1.xpose.msra.mxu0 %v204
    %403 = vmatprep.subr.mxu0 0.0
    %404 = vmatpush1.xpose.msra.mxu0 %v201
    %405 = vmatprep.subr.mxu0 0.0
    %406 = vmatpush2.xpose.msra.mxu0 %v294
    %407 = vmatprep.subr.mxu0 0.0
    %408 = vmatpush2.xpose.msra.mxu0 %v291
    %409 = vmatprep.subr.mxu0 0.0
    %410 = vmatpush2.xpose.msra.mxu0 %v288
    %411 = vmatprep.subr.mxu0 0.0
    %412 = vmatpush2.xpose.msra.mxu0 %v285
    %413 = vmatprep.subr.mxu0 0.0
    %414 = vmatpush2.xpose.msra.mxu0 %v282
    %415 = vmatprep.subr.mxu0 0.0
    %416 = vmatpush2.xpose.msra.mxu0 %v279
    %417 = vmatprep.subr.mxu0 0.0
    %418 = vmatpush2.xpose.msra.mxu0 %v276
    %419 = vmatprep.subr.mxu0 0.0
    %420 = vmatpush2.xpose.msra.mxu0 %v273
    %421 = vmatprep.subr.mxu0 0.0
    %422 = vmatpush2.xpose.msra.mxu0 %v270
    %423 = vmatprep.subr.mxu0 0.0
    %424 = vmatpush2.xpose.msra.mxu0 %v267
    %425 = vmatprep.subr.mxu0 0.0
    %426 = vmatpush2.xpose.msra.mxu0 %v264
    %427 = vmatprep.subr.mxu0 0.0
    %428 = vmatpush2.xpose.msra.mxu0 %v261
    %429 = vmatprep.subr.mxu0 0.0
    %430 = vmatpush2.xpose.msra.mxu0 %v258
    %431 = vmatprep.subr.mxu0 0.0
    %432 = vmatpush2.xpose.msra.mxu0 %v255
    %433 = vmatprep.subr.mxu0 0.0
    %434 = vmatpush2.xpose.msra.mxu0 %v252
    %435 = vmatprep.subr.mxu0 0.0
    %436 = vmatpush2.xpose.msra.mxu0 %v249
    %437 = vmatprep.mubr.f32.mxu0 0.0
    %438 = vmatmul.mubr.f32.gmra.mxu0 %v99
    %v439 = vpop.f32.mrf.mxu0
    %v440 = vadd.f32 %v90, %v439
    %v441 = vpop.f32.mrf.mxu0
    %v442 = vadd.f32 %v90, %v441
    %443 = vmatprep.mubr.f32.mxu0 0.0
    %444 = vmatmul.mubr.f32.gmra.mxu0 %v102
    %v445 = vpop.f32.mrf.mxu0
    %v446 = vadd.f32 %v95, %v445
    %v447 = vpop.f32.mrf.mxu0
    %v448 = vadd.f32 %v95, %v447
    %449 = vdwg.mxu0
    %v450 = vmax.f32 %v363, 0.0
    %v451 = vmax.f32 %v365, 0.0
    %v452 = vmax.f32 %v440, 0.0
    %v453 = vmax.f32 %v442, 0.0
    %v454 = vmax.f32 %v369, 0.0
    %v455 = vmax.f32 %v371, 0.0
    %v456 = vmax.f32 %v446, 0.0
    %v457 = vmax.f32 %v448, 0.0
    %458 = vset.pattern.permute.xlu0 1
    %459 = vperm.xlu0 %458, %v83
    %v460 = vpop.permute.xlu0 %459
    %462 = vset.pattern.permute.xlu0 1
    %463 = vperm.xlu0 %462, %v84
    %v464 = vpop.permute.xlu0 %463
    %vm466 = vcmask 80896
    %v468 = vsel %vm466, %v78, 0
    %v471 = vsel %vm466, %v79, 0
    %vm473 = vcmask 1041408
    %v475 = vsel %vm473, %v454, 0
    %v478 = vsel %vm473, %v455, 0
    %v481 = vsel %vm473, %v456, 0
    %v484 = vsel %vm473, %v457, 0
    %486 = vmatprep.subr.mxu0 0.0
    %487 = vmatpush1.msra.mxu0 0.0
    %488 = vmatprep.subr.mxu0 0.0
    %489 = vmatpush1.msra.mxu0 0.0
    %490 = vmatprep.subr.mxu0 0.0
    %491 = vmatpush1.msra.mxu0 0.0
    %492 = vmatprep.subr.mxu0 0.0
    %493 = vmatpush1.msra.mxu0 0.0
    %494 = vmatprep.subr.mxu0 0.0
    %495 = vmatpush1.msra.mxu0 0.0
    %496 = vmatprep.subr.mxu0 0.0
    %497 = vmatpush1.msra.mxu0 0.0
    %498 = vmatprep.subr.mxu0 0.0
    %499 = vmatpush1.msra.mxu0 0.0
    %500 = vmatprep.subr.mxu0 0.0
    %501 = vmatpush1.msra.mxu0 0.0
    %502 = vmatprep.subr.mxu0 0.0
    %503 = vmatpush1.msra.mxu0 0.0
    %504 = vmatprep.subr.mxu0 0.0
    %505 = vmatpush1.msra.mxu0 0.0
    %506 = vmatprep.subr.mxu0 0.0
    %507 = vmatpush1.msra.mxu0 0.0
    %508 = vmatprep.subr.mxu0 0.0
    %509 = vmatpush1.msra.mxu0 0.0
    %510 = vmatprep.subr.mxu0 0.0
    %511 = vmatpush1.msra.mxu0 0.0
    %512 = vmatprep.subr.mxu0 0.0
    %513 = vmatpush1.msra.mxu0 0.0
    %514 = vmatprep.subr.mxu0 %v478
    %515 = vmatpush1.msra.mxu0 %v475
    %516 = vmatprep.subr.mxu0 %v451
    %517 = vmatpush1.msra.mxu0 %v450
    %518 = vmatprep.subr.mxu0 0.0
    %519 = vmatpush2.msra.mxu0 0.0
    %520 = vmatprep.subr.mxu0 0.0
    %521 = vmatpush2.msra.mxu0 0.0
    %522 = vmatprep.subr.mxu0 0.0
    %523 = vmatpush2.msra.mxu0 0.0
    %524 = vmatprep.subr.mxu0 0.0
    %525 = vmatpush2.msra.mxu0 0.0
    %526 = vmatprep.subr.mxu0 0.0
    %527 = vmatpush2.msra.mxu0 0.0
    %528 = vmatprep.subr.mxu0 0.0
    %529 = vmatpush2.msra.mxu0 0.0
    %530 = vmatprep.subr.mxu0 0.0
    %531 = vmatpush2.msra.mxu0 0.0
    %532 = vmatprep.subr.mxu0 0.0
    %533 = vmatpush2.msra.mxu0 0.0
    %534 = vmatprep.subr.mxu0 0.0
    %535 = vmatpush2.msra.mxu0 0.0
    %536 = vmatprep.subr.mxu0 0.0
    %537 = vmatpush2.msra.mxu0 0.0
    %538 = vmatprep.subr.mxu0 0.0
    %539 = vmatpush2.msra.mxu0 0.0
    %540 = vmatprep.subr.mxu0 0.0
    %541 = vmatpush2.msra.mxu0 0.0
    %542 = vmatprep.subr.mxu0 0.0
    %543 = vmatpush2.msra.mxu0 0.0
    %544 = vmatprep.subr.mxu0 0.0
    %545 = vmatpush2.msra.mxu0 0.0
    %546 = vmatprep.subr.mxu0 0.0
    %547 = vmatpush2.msra.mxu0 0.0
    %548 = vmatprep.subr.mxu0 0.0
    %549 = vmatpush2.msra.mxu0 0.0
    %550 = vmatprep.mubr.f32.mxu0 0.0
    %551 = vmatmul.mubr.f32.gmra.mxu0 %v468
    %v552 = vpop.f32.mrf.mxu0
    %v553 = vadd.f32 %v460, %v552
    %v554 = vpop.f32.mrf.mxu0
    %v555 = vadd.f32 %v460, %v554
    %556 = vmatprep.mubr.f32.mxu0 0.0
    %557 = vmatmul.mubr.f32.gmra.mxu0 %v471
    %v558 = vpop.f32.mrf.mxu0
    %v559 = vadd.f32 %v464, %v558
    %v560 = vpop.f32.mrf.mxu0
    %v561 = vadd.f32 %v464, %v560
    %562 = vdwg.mxu0
    %563 = vmatprep.subr.mxu0 0.0
    %564 = vmatpush1.msra.mxu0 0.0
    %565 = vmatprep.subr.mxu0 0.0
    %566 = vmatpush1.msra.mxu0 0.0
    %567 = vmatprep.subr.mxu0 0.0
    %568 = vmatpush1.msra.mxu0 0.0
    %569 = vmatprep.subr.mxu0 0.0
    %570 = vmatpush1.msra.mxu0 0.0
    %571 = vmatprep.subr.mxu0 0.0
    %572 = vmatpush1.msra.mxu0 0.0
    %573 = vmatprep.subr.mxu0 0.0
    %574 = vmatpush1.msra.mxu0 0.0
    %575 = vmatprep.subr.mxu0 0.0
    %576 = vmatpush1.msra.mxu0 0.0
    %577 = vmatprep.subr.mxu0 0.0
    %578 = vmatpush1.msra.mxu0 0.0
    %579 = vmatprep.subr.mxu0 0.0
    %580 = vmatpush1.msra.mxu0 0.0
    %581 = vmatprep.subr.mxu0 0.0
    %582 = vmatpush1.msra.mxu0 0.0
    %583 = vmatprep.subr.mxu0 0.0
    %584 = vmatpush1.msra.mxu0 0.0
    %585 = vmatprep.subr.mxu0 0.0
    %586 = vmatpush1.msra.mxu0 0.0
    %587 = vmatprep.subr.mxu0 0.0
    %588 = vmatpush1.msra.mxu0 0.0
    %589 = vmatprep.subr.mxu0 0.0
    %590 = vmatpush1.msra.mxu0 0.0
    %591 = vmatprep.subr.mxu0 %v484
    %592 = vmatpush1.msra.mxu0 %v481
    %593 = vmatprep.subr.mxu0 %v453
    %594 = vmatpush1.msra.mxu0 %v452
    %595 = vmatprep.subr.mxu0 0.0
    %596 = vmatpush2.msra.mxu0 0.0
    %597 = vmatprep.subr.mxu0 0.0
    %598 = vmatpush2.msra.mxu0 0.0
    %599 = vmatprep.subr.mxu0 0.0
    %600 = vmatpush2.msra.mxu0 0.0
    %601 = vmatprep.subr.mxu0 0.0
    %602 = vmatpush2.msra.mxu0 0.0
    %603 = vmatprep.subr.mxu0 0.0
    %604 = vmatpush2.msra.mxu0 0.0
    %605 = vmatprep.subr.mxu0 0.0
    %606 = vmatpush2.msra.mxu0 0.0
    %607 = vmatprep.subr.mxu0 0.0
    %608 = vmatpush2.msra.mxu0 0.0
    %609 = vmatprep.subr.mxu0 0.0
    %610 = vmatpush2.msra.mxu0 0.0
    %611 = vmatprep.subr.mxu0 0.0
    %612 = vmatpush2.msra.mxu0 0.0
    %613 = vmatprep.subr.mxu0 0.0
    %614 = vmatpush2.msra.mxu0 0.0
    %615 = vmatprep.subr.mxu0 0.0
    %616 = vmatpush2.msra.mxu0 0.0
    %617 = vmatprep.subr.mxu0 0.0
    %618 = vmatpush2.msra.mxu0 0.0
    %619 = vmatprep.subr.mxu0 0.0
    %620 = vmatpush2.msra.mxu0 0.0
    %621 = vmatprep.subr.mxu0 0.0
    %622 = vmatpush2.msra.mxu0 0.0
    %623 = vmatprep.subr.mxu0 0.0
    %624 = vmatpush2.msra.mxu0 0.0
    %625 = vmatprep.subr.mxu0 0.0
    %626 = vmatpush2.msra.mxu0 0.0
    %627 = vmatprep.mubr.f32.mxu0 0.0
    %628 = vmatmul.mubr.f32.gmra.mxu0 %v468
    %v629 = vpop.f32.mrf.mxu0
    %v630 = vadd.f32 %v460, %v629
    %v631 = vpop.f32.mrf.mxu0
    %v632 = vadd.f32 %v460, %v631
    %633 = vmatprep.mubr.f32.mxu0 0.0
    %634 = vmatmul.mubr.f32.gmra.mxu0 %v471
    %v635 = vpop.f32.mrf.mxu0
    %v636 = vadd.f32 %v464, %v635
    %v637 = vpop.f32.mrf.mxu0
    %v638 = vadd.f32 %v464, %v637
    %639 = vdwg.mxu0
    %v640 = vmax.f32 %v553, 0.0
    %v641 = vmax.f32 %v555, 0.0
    %v642 = vmax.f32 %v630, 0.0
    %v643 = vmax.f32 %v632, 0.0
    %v644 = vmax.f32 %v559, 0.0
    %v645 = vmax.f32 %v561, 0.0
    %v646 = vmax.f32 %v636, 0.0
    %v647 = vmax.f32 %v638, 0.0
    %649 = vset.pattern.permute.xlu0 2
    %650 = vperm.xlu0 %649, %v85
    %v651 = vpop.permute.xlu0 %650
    %v654 = vsel %vm466, %v80, 0
    %v657 = vsel %vm473, %v644, 0
    %v660 = vsel %vm473, %v645, 0
    %v663 = vsel %vm473, %v646, 0
    %v666 = vsel %vm473, %v647, 0
    %668 = vmatprep.subr.mxu0 0.0
    %669 = vmatpush1.msra.mxu0 0.0
    %670 = vmatprep.subr.mxu0 0.0
    %671 = vmatpush1.msra.mxu0 0.0
    %672 = vmatprep.subr.mxu0 0.0
    %673 = vmatpush1.msra.mxu0 0.0
    %674 = vmatprep.subr.mxu0 0.0
    %675 = vmatpush1.msra.mxu0 0.0
    %676 = vmatprep.subr.mxu0 0.0
    %677 = vmatpush1.msra.mxu0 0.0
    %678 = vmatprep.subr.mxu0 0.0
    %679 = vmatpush1.msra.mxu0 0.0
    %680 = vmatprep.subr.mxu0 0.0
    %681 = vmatpush1.msra.mxu0 0.0
    %682 = vmatprep.subr.mxu0 0.0
    %683 = vmatpush1.msra.mxu0 0.0
    %684 = vmatprep.subr.mxu0 0.0
    %685 = vmatpush1.msra.mxu0 0.0
    %686 = vmatprep.subr.mxu0 0.0
    %687 = vmatpush1.msra.mxu0 0.0
    %688 = vmatprep.subr.mxu0 0.0
    %689 = vmatpush1.msra.mxu0 0.0
    %690 = vmatprep.subr.mxu0 0.0
    %691 = vmatpush1.msra.mxu0 0.0
    %692 = vmatprep.subr.mxu0 0.0
    %693 = vmatpush1.msra.mxu0 0.0
    %694 = vmatprep.subr.mxu0 0.0
    %695 = vmatpush1.msra.mxu0 0.0
    %696 = vmatprep.subr.mxu0 %v660
    %697 = vmatpush1.msra.mxu0 %v657
    %698 = vmatprep.subr.mxu0 %v641
    %699 = vmatpush1.msra.mxu0 %v640
    %700 = vmatprep.subr.mxu0 0.0
    %701 = vmatpush2.msra.mxu0 0.0
    %702 = vmatprep.subr.mxu0 0.0
    %703 = vmatpush2.msra.mxu0 0.0
    %704 = vmatprep.subr.mxu0 0.0
    %705 = vmatpush2.msra.mxu0 0.0
    %706 = vmatprep.subr.mxu0 0.0
    %707 = vmatpush2.msra.mxu0 0.0
    %708 = vmatprep.subr.mxu0 0.0
    %709 = vmatpush2.msra.mxu0 0.0
    %710 = vmatprep.subr.mxu0 0.0
    %711 = vmatpush2.msra.mxu0 0.0
    %712 = vmatprep.subr.mxu0 0.0
    %713 = vmatpush2.msra.mxu0 0.0
    %714 = vmatprep.subr.mxu0 0.0
    %715 = vmatpush2.msra.mxu0 0.0
    %716 = vmatprep.subr.mxu0 0.0
    %717 = vmatpush2.msra.mxu0 0.0
    %718 = vmatprep.subr.mxu0 0.0
    %719 = vmatpush2.msra.mxu0 0.0
    %720 = vmatprep.subr.mxu0 0.0
    %721 = vmatpush2.msra.mxu0 0.0
    %722 = vmatprep.subr.mxu0 0.0
    %723 = vmatpush2.msra.mxu0 0.0
    %724 = vmatprep.subr.mxu0 0.0
    %725 = vmatpush2.msra.mxu0 0.0
    %726 = vmatprep.subr.mxu0 0.0
    %727 = vmatpush2.msra.mxu0 0.0
    %728 = vmatprep.subr.mxu0 0.0
    %729 = vmatpush2.msra.mxu0 0.0
    %730 = vmatprep.subr.mxu0 0.0
    %731 = vmatpush2.msra.mxu0 0.0
    %732 = vmatprep.mubr.f32.mxu0 0.0
    %733 = vmatmul.mubr.f32.gmra.mxu0 %v654
    %v734 = vpop.f32.mrf.mxu0
    %v735 = vadd.f32 %v651, %v734
    %v736 = vpop.f32.mrf.mxu0
    %v737 = vadd.f32 %v651, %v736
    %738 = vdwg.mxu0
    %739 = vmatprep.subr.mxu0 0.0
    %740 = vmatpush1.msra.mxu0 0.0
    %741 = vmatprep.subr.mxu0 0.0
    %742 = vmatpush1.msra.mxu0 0.0
    %743 = vmatprep.subr.mxu0 0.0
    %744 = vmatpush1.msra.mxu0 0.0
    %745 = vmatprep.subr.mxu0 0.0
    %746 = vmatpush1.msra.mxu0 0.0
    %747 = vmatprep.subr.mxu0 0.0
    %748 = vmatpush1.msra.mxu0 0.0
    %749 = vmatprep.subr.mxu0 0.0
    %750 = vmatpush1.msra.mxu0 0.0
    %751 = vmatprep.subr.mxu0 0.0
    %752 = vmatpush1.msra.mxu0 0.0
    %753 = vmatprep.subr.mxu0 0.0
    %754 = vmatpush1.msra.mxu0 0.0
    %755 = vmatprep.subr.mxu0 0.0
    %756 = vmatpush1.msra.mxu0 0.0
    %757 = vmatprep.subr.mxu0 0.0
    %758 = vmatpush1.msra.mxu0 0.0
    %759 = vmatprep.subr.mxu0 0.0
    %760 = vmatpush1.msra.mxu0 0.0
    %761 = vmatprep.subr.mxu0 0.0
    %762 = vmatpush1.msra.mxu0 0.0
    %763 = vmatprep.subr.mxu0 0.0
    %764 = vmatpush1.msra.mxu0 0.0
    %765 = vmatprep.subr.mxu0 0.0
    %766 = vmatpush1.msra.mxu0 0.0
    %767 = vmatprep.subr.mxu0 %v666
    %768 = vmatpush1.msra.mxu0 %v663
    %769 = vmatprep.subr.mxu0 %v643
    %770 = vmatpush1.msra.mxu0 %v642
    %771 = vmatprep.subr.mxu0 0.0
    %772 = vmatpush2.msra.mxu0 0.0
    %773 = vmatprep.subr.mxu0 0.0
    %774 = vmatpush2.msra.mxu0 0.0
    %775 = vmatprep.subr.mxu0 0.0
    %776 = vmatpush2.msra.mxu0 0.0
    %777 = vmatprep.subr.mxu0 0.0
    %778 = vmatpush2.msra.mxu0 0.0
    %779 = vmatprep.subr.mxu0 0.0
    %780 = vmatpush2.msra.mxu0 0.0
    %781 = vmatprep.subr.mxu0 0.0
    %782 = vmatpush2.msra.mxu0 0.0
    %783 = vmatprep.subr.mxu0 0.0
    %784 = vmatpush2.msra.mxu0 0.0
    %785 = vmatprep.subr.mxu0 0.0
    %786 = vmatpush2.msra.mxu0 0.0
    %787 = vmatprep.subr.mxu0 0.0
    %788 = vmatpush2.msra.mxu0 0.0
    %789 = vmatprep.subr.mxu0 0.0
    %790 = vmatpush2.msra.mxu0 0.0
    %791 = vmatprep.subr.mxu0 0.0
    %792 = vmatpush2.msra.mxu0 0.0
    %793 = vmatprep.subr.mxu0 0.0
    %794 = vmatpush2.msra.mxu0 0.0
    %795 = vmatprep.subr.mxu0 0.0
    %796 = vmatpush2.msra.mxu0 0.0
    %797 = vmatprep.subr.mxu0 0.0
    %798 = vmatpush2.msra.mxu0 0.0
    %799 = vmatprep.subr.mxu0 0.0
    %800 = vmatpush2.msra.mxu0 0.0
    %801 = vmatprep.subr.mxu0 0.0
    %802 = vmatpush2.msra.mxu0 0.0
    %803 = vmatprep.mubr.f32.mxu0 0.0
    %804 = vmatmul.mubr.f32.gmra.mxu0 %v654
    %v805 = vpop.f32.mrf.mxu0
    %v806 = vadd.f32 %v651, %v805
    %v807 = vpop.f32.mrf.mxu0
    %v808 = vadd.f32 %v651, %v807
    %809 = vdwg.mxu0
    %v810 = vmax.f32 %v735, 0.0
    %v811 = vmax.f32 %v737, 0.0
    %v812 = vmax.f32 %v806, 0.0
    %v813 = vmax.f32 %v808, 0.0
    %814 = vset.pattern.permute.xlu0 3
    %815 = vperm.xlu0 %814, %v85
    %v816 = vpop.permute.xlu0 %815
    %vm818 = vcmask 39936
    %v820 = vsel %vm818, %v81, 0
    %vm822 = vcmask 1044480
    %v824 = vsel %vm822, %v810, 0
    %v827 = vsel %vm822, %v811, 0
    %v830 = vsel %vm822, %v812, 0
    %v833 = vsel %vm822, %v813, 0
    %835 = vmatprep.subr.mxu0 0.0
    %836 = vmatpush1.msra.mxu0 0.0
    %837 = vmatprep.subr.mxu0 0.0
    %838 = vmatpush1.msra.mxu0 0.0
    %839 = vmatprep.subr.mxu0 0.0
    %840 = vmatpush1.msra.mxu0 0.0
    %841 = vmatprep.subr.mxu0 0.0
    %842 = vmatpush1.msra.mxu0 0.0
    %843 = vmatprep.subr.mxu0 0.0
    %844 = vmatpush1.msra.mxu0 0.0
    %845 = vmatprep.subr.mxu0 0.0
    %846 = vmatpush1.msra.mxu0 0.0
    %847 = vmatprep.subr.mxu0 0.0
    %848 = vmatpush1.msra.mxu0 0.0
    %849 = vmatprep.subr.mxu0 0.0
    %850 = vmatpush1.msra.mxu0 0.0
    %851 = vmatprep.subr.mxu0 0.0
    %852 = vmatpush1.msra.mxu0 0.0
    %853 = vmatprep.subr.mxu0 0.0
    %854 = vmatpush1.msra.mxu0 0.0
    %855 = vmatprep.subr.mxu0 0.0
    %856 = vmatpush1.msra.mxu0 0.0
    %857 = vmatprep.subr.mxu0 0.0
    %858 = vmatpush1.msra.mxu0 0.0
    %859 = vmatprep.subr.mxu0 0.0
    %860 = vmatpush1.msra.mxu0 0.0
    %861 = vmatprep.subr.mxu0 0.0
    %862 = vmatpush1.msra.mxu0 0.0
    %863 = vmatprep.subr.mxu0 0.0
    %864 = vmatpush1.msra.mxu0 0.0
    %865 = vmatprep.subr.mxu0 %v827
    %866 = vmatpush1.msra.mxu0 %v824
    %867 = vmatprep.subr.mxu0 0.0
    %868 = vmatpush2.msra.mxu0 0.0
    %869 = vmatprep.subr.mxu0 0.0
    %870 = vmatpush2.msra.mxu0 0.0
    %871 = vmatprep.subr.mxu0 0.0
    %872 = vmatpush2.msra.mxu0 0.0
    %873 = vmatprep.subr.mxu0 0.0
    %874 = vmatpush2.msra.mxu0 0.0
    %875 = vmatprep.subr.mxu0 0.0
    %876 = vmatpush2.msra.mxu0 0.0
    %877 = vmatprep.subr.mxu0 0.0
    %878 = vmatpush2.msra.mxu0 0.0
    %879 = vmatprep.subr.mxu0 0.0
    %880 = vmatpush2.msra.mxu0 0.0
    %881 = vmatprep.subr.mxu0 0.0
    %882 = vmatpush2.msra.mxu0 0.0
    %883 = vmatprep.subr.mxu0 0.0
    %884 = vmatpush2.msra.mxu0 0.0
    %885 = vmatprep.subr.mxu0 0.0
    %886 = vmatpush2.msra.mxu0 0.0
    %887 = vmatprep.subr.mxu0 0.0
    %888 = vmatpush2.msra.mxu0 0.0
    %889 = vmatprep.subr.mxu0 0.0
    %890 = vmatpush2.msra.mxu0 0.0
    %891 = vmatprep.subr.mxu0 0.0
    %892 = vmatpush2.msra.mxu0 0.0
    %893 = vmatprep.subr.mxu0 0.0
    %894 = vmatpush2.msra.mxu0 0.0
    %895 = vmatprep.subr.mxu0 0.0
    %896 = vmatpush2.msra.mxu0 0.0
    %897 = vmatprep.subr.mxu0 0.0
    %898 = vmatpush2.msra.mxu0 0.0
    %899 = vmatprep.mubr.f32.mxu0 0.0
    %900 = vmatmul.mubr.f32.gmra.mxu0 %v820
    %v901 = vpop.f32.mrf.mxu0
    %v902 = vadd.f32 %v816, %v901
    %v903 = vpop.f32.mrf.mxu0
    %v904 = vadd.f32 %v816, %v903
    %905 = vdwg.mxu0
    %906 = vmatprep.subr.mxu0 0.0
    %907 = vmatpush1.msra.mxu0 0.0
    %908 = vmatprep.subr.mxu0 0.0
    %909 = vmatpush1.msra.mxu0 0.0
    %910 = vmatprep.subr.mxu0 0.0
    %911 = vmatpush1.msra.mxu0 0.0
    %912 = vmatprep.subr.mxu0 0.0
    %913 = vmatpush1.msra.mxu0 0.0
    %914 = vmatprep.subr.mxu0 0.0
    %915 = vmatpush1.msra.mxu0 0.0
    %916 = vmatprep.subr.mxu0 0.0
    %917 = vmatpush1.msra.mxu0 0.0
    %918 = vmatprep.subr.mxu0 0.0
    %919 = vmatpush1.msra.mxu0 0.0
    %920 = vmatprep.subr.mxu0 0.0
    %921 = vmatpush1.msra.mxu0 0.0
    %922 = vmatprep.subr.mxu0 0.0
    %923 = vmatpush1.msra.mxu0 0.0
    %924 = vmatprep.subr.mxu0 0.0
    %925 = vmatpush1.msra.mxu0 0.0
    %926 = vmatprep.subr.mxu0 0.0
    %927 = vmatpush1.msra.mxu0 0.0
    %928 = vmatprep.subr.mxu0 0.0
    %929 = vmatpush1.msra.mxu0 0.0
    %930 = vmatprep.subr.mxu0 0.0
    %931 = vmatpush1.msra.mxu0 0.0
    %932 = vmatprep.subr.mxu0 0.0
    %933 = vmatpush1.msra.mxu0 0.0
    %934 = vmatprep.subr.mxu0 0.0
    %935 = vmatpush1.msra.mxu0 0.0
    %936 = vmatprep.subr.mxu0 %v833
    %937 = vmatpush1.msra.mxu0 %v830
    %938 = vmatprep.subr.mxu0 0.0
    %939 = vmatpush2.msra.mxu0 0.0
    %940 = vmatprep.subr.mxu0 0.0
    %941 = vmatpush2.msra.mxu0 0.0
    %942 = vmatprep.subr.mxu0 0.0
    %943 = vmatpush2.msra.mxu0 0.0
    %944 = vmatprep.subr.mxu0 0.0
    %945 = vmatpush2.msra.mxu0 0.0
    %946 = vmatprep.subr.mxu0 0.0
    %947 = vmatpush2.msra.mxu0 0.0
    %948 = vmatprep.subr.mxu0 0.0
    %949 = vmatpush2.msra.mxu0 0.0
    %950 = vmatprep.subr.mxu0 0.0
    %951 = vmatpush2.msra.mxu0 0.0
    %952 = vmatprep.subr.mxu0 0.0
    %953 = vmatpush2.msra.mxu0 0.0
    %954 = vmatprep.subr.mxu0 0.0
    %955 = vmatpush2.msra.mxu0 0.0
    %956 = vmatprep.subr.mxu0 0.0
    %957 = vmatpush2.msra.mxu0 0.0
    %958 = vmatprep.subr.mxu0 0.0
    %959 = vmatpush2.msra.mxu0 0.0
    %960 = vmatprep.subr.mxu0 0.0
    %961 = vmatpush2.msra.mxu0 0.0
    %962 = vmatprep.subr.mxu0 0.0
    %963 = vmatpush2.msra.mxu0 0.0
    %964 = vmatprep.subr.mxu0 0.0
    %965 = vmatpush2.msra.mxu0 0.0
    %966 = vmatprep.subr.mxu0 0.0
    %967 = vmatpush2.msra.mxu0 0.0
    %968 = vmatprep.subr.mxu0 0.0
    %969 = vmatpush2.msra.mxu0 0.0
    %970 = vmatprep.mubr.f32.mxu0 0.0
    %971 = vmatmul.mubr.f32.gmra.mxu0 %v820
    %v972 = vpop.f32.mrf.mxu0
    %v973 = vadd.f32 %v816, %v972
    %v974 = vpop.f32.mrf.mxu0
    %v975 = vadd.f32 %v816, %v974
    %976 = vdwg.mxu0
    %v977 = vmax.f32 %v902, 0.0
    %v978 = vmax.f32 %v904, 0.0
    %v979 = vmax.f32 %v973, 0.0
    %v980 = vmax.f32 %v975, 0.0
    %982 = vset.pattern.permute.xlu0 4
    %983 = vperm.xlu0 %982, %v86
    %v984 = vpop.permute.xlu0 %983
    %v987 = vsel %vm818, %v82, 0
    %v990 = vsel %vm822, %v977, 0
    %v993 = vsel %vm822, %v978, 0
    %v996 = vsel %vm822, %v979, 0
    %v999 = vsel %vm822, %v980, 0
    %1001 = vmatprep.subr.mxu0 0.0
    %1002 = vmatpush1.msra.mxu0 0.0
    %1003 = vmatprep.subr.mxu0 0.0
    %1004 = vmatpush1.msra.mxu0 0.0
    %1005 = vmatprep.subr.mxu0 0.0
    %1006 = vmatpush1.msra.mxu0 0.0
    %1007 = vmatprep.subr.mxu0 0.0
    %1008 = vmatpush1.msra.mxu0 0.0
    %1009 = vmatprep.subr.mxu0 0.0
    %1010 = vmatpush1.msra.mxu0 0.0
    %1011 = vmatprep.subr.mxu0 0.0
    %1012 = vmatpush1.msra.mxu0 0.0
    %1013 = vmatprep.subr.mxu0 0.0
    %1014 = vmatpush1.msra.mxu0 0.0
    %1015 = vmatprep.subr.mxu0 0.0
    %1016 = vmatpush1.msra.mxu0 0.0
    %1017 = vmatprep.subr.mxu0 0.0
    %1018 = vmatpush1.msra.mxu0 0.0
    %1019 = vmatprep.subr.mxu0 0.0
    %1020 = vmatpush1.msra.mxu0 0.0
    %1021 = vmatprep.subr.mxu0 0.0
    %1022 = vmatpush1.msra.mxu0 0.0
    %1023 = vmatprep.subr.mxu0 0.0
    %1024 = vmatpush1.msra.mxu0 0.0
    %1025 = vmatprep.subr.mxu0 0.0
    %1026 = vmatpush1.msra.mxu0 0.0
    %1027 = vmatprep.subr.mxu0 0.0
    %1028 = vmatpush1.msra.mxu0 0.0
    %1029 = vmatprep.subr.mxu0 0.0
    %1030 = vmatpush1.msra.mxu0 0.0
    %1031 = vmatprep.subr.mxu0 %v993
    %1032 = vmatpush1.msra.mxu0 %v990
    %1033 = vmatprep.subr.mxu0 0.0
    %1034 = vmatpush2.msra.mxu0 0.0
    %1035 = vmatprep.subr.mxu0 0.0
    %1036 = vmatpush2.msra.mxu0 0.0
    %1037 = vmatprep.subr.mxu0 0.0
    %1038 = vmatpush2.msra.mxu0 0.0
    %1039 = vmatprep.subr.mxu0 0.0
    %1040 = vmatpush2.msra.mxu0 0.0
    %1041 = vmatprep.subr.mxu0 0.0
    %1042 = vmatpush2.msra.mxu0 0.0
    %1043 = vmatprep.subr.mxu0 0.0
    %1044 = vmatpush2.msra.mxu0 0.0
    %1045 = vmatprep.subr.mxu0 0.0
    %1046 = vmatpush2.msra.mxu0 0.0
    %1047 = vmatprep.subr.mxu0 0.0
    %1048 = vmatpush2.msra.mxu0 0.0
    %1049 = vmatprep.subr.mxu0 0.0
    %1050 = vmatpush2.msra.mxu0 0.0
    %1051 = vmatprep.subr.mxu0 0.0
    %1052 = vmatpush2.msra.mxu0 0.0
    %1053 = vmatprep.subr.mxu0 0.0
    %1054 = vmatpush2.msra.mxu0 0.0
    %1055 = vmatprep.subr.mxu0 0.0
    %1056 = vmatpush2.msra.mxu0 0.0
    %1057 = vmatprep.subr.mxu0 0.0
    %1058 = vmatpush2.msra.mxu0 0.0
    %1059 = vmatprep.subr.mxu0 0.0
    %1060 = vmatpush2.msra.mxu0 0.0
    %1061 = vmatprep.subr.mxu0 0.0
    %1062 = vmatpush2.msra.mxu0 0.0
    %1063 = vmatprep.subr.mxu0 0.0
    %1064 = vmatpush2.msra.mxu0 0.0
    %1065 = vmatprep.mubr.f32.mxu0 0.0
    %1066 = vmatmul.mubr.f32.gmra.mxu0 %v987
    %v1067 = vpop.f32.mrf.mxu0
    %v1068 = vadd.f32 %v984, %v1067
    %v1069 = vpop.f32.mrf.mxu0
    %v1070 = vadd.f32 %v984, %v1069
    %1071 = vdwg.mxu0
    %1072 = vmatprep.subr.mxu0 0.0
    %1073 = vmatpush1.msra.mxu0 0.0
    %1074 = vmatprep.subr.mxu0 0.0
    %1075 = vmatpush1.msra.mxu0 0.0
    %1076 = vmatprep.subr.mxu0 0.0
    %1077 = vmatpush1.msra.mxu0 0.0
    %1078 = vmatprep.subr.mxu0 0.0
    %1079 = vmatpush1.msra.mxu0 0.0
    %1080 = vmatprep.subr.mxu0 0.0
    %1081 = vmatpush1.msra.mxu0 0.0
    %1082 = vmatprep.subr.mxu0 0.0
    %1083 = vmatpush1.msra.mxu0 0.0
    %1084 = vmatprep.subr.mxu0 0.0
    %1085 = vmatpush1.msra.mxu0 0.0
    %1086 = vmatprep.subr.mxu0 0.0
    %1087 = vmatpush1.msra.mxu0 0.0
    %1088 = vmatprep.subr.mxu0 0.0
    %1089 = vmatpush1.msra.mxu0 0.0
    %1090 = vmatprep.subr.mxu0 0.0
    %1091 = vmatpush1.msra.mxu0 0.0
    %1092 = vmatprep.subr.mxu0 0.0
    %1093 = vmatpush1.msra.mxu0 0.0
    %1094 = vmatprep.subr.mxu0 0.0
    %1095 = vmatpush1.msra.mxu0 0.0
    %1096 = vmatprep.subr.mxu0 0.0
    %1097 = vmatpush1.msra.mxu0 0.0
    %1098 = vmatprep.subr.mxu0 0.0
    %1099 = vmatpush1.msra.mxu0 0.0
    %1100 = vmatprep.subr.mxu0 0.0
    %1101 = vmatpush1.msra.mxu0 0.0
    %1102 = vmatprep.subr.mxu0 %v999
    %1103 = vmatpush1.msra.mxu0 %v996
    %1104 = vmatprep.subr.mxu0 0.0
    %1105 = vmatpush2.msra.mxu0 0.0
    %1106 = vmatprep.subr.mxu0 0.0
    %1107 = vmatpush2.msra.mxu0 0.0
    %1108 = vmatprep.subr.mxu0 0.0
    %1109 = vmatpush2.msra.mxu0 0.0
    %1110 = vmatprep.subr.mxu0 0.0
    %1111 = vmatpush2.msra.mxu0 0.0
    %1112 = vmatprep.subr.mxu0 0.0
    %1113 = vmatpush2.msra.mxu0 0.0
    %1114 = vmatprep.subr.mxu0 0.0
    %1115 = vmatpush2.msra.mxu0 0.0
    %1116 = vmatprep.subr.mxu0 0.0
    %1117 = vmatpush2.msra.mxu0 0.0
    %1118 = vmatprep.subr.mxu0 0.0
    %1119 = vmatpush2.msra.mxu0 0.0
    %1120 = vmatprep.subr.mxu0 0.0
    %1121 = vmatpush2.msra.mxu0 0.0
    %1122 = vmatprep.subr.mxu0 0.0
    %1123 = vmatpush2.msra.mxu0 0.0
    %1124 = vmatprep.subr.mxu0 0.0
    %1125 = vmatpush2.msra.mxu0 0.0
    %1126 = vmatprep.subr.mxu0 0.0
    %1127 = vmatpush2.msra.mxu0 0.0
    %1128 = vmatprep.subr.mxu0 0.0
    %1129 = vmatpush2.msra.mxu0 0.0
    %1130 = vmatprep.subr.mxu0 0.0
    %1131 = vmatpush2.msra.mxu0 0.0
    %1132 = vmatprep.subr.mxu0 0.0
    %1133 = vmatpush2.msra.mxu0 0.0
    %1134 = vmatprep.subr.mxu0 0.0
    %1135 = vmatpush2.msra.mxu0 0.0
    %1136 = vmatprep.mubr.f32.mxu0 0.0
    %1137 = vmatmul.mubr.f32.gmra.mxu0 %v987
    %v1138 = vpop.f32.mrf.mxu0
    %v1139 = vadd.f32 %v984, %v1138
    %v1140 = vpop.f32.mrf.mxu0
    %v1141 = vadd.f32 %v984, %v1140
    %1142 = vdwg.mxu0
    %v1143 = vsub.f32 0.0, %v1068
    %v1144 = vsub.f32 0.0, %v1070
    %v1145 = vsub.f32 0.0, %v1139
    %v1146 = vsub.f32 0.0, %v1141
    %v1147 = vmul.f32 %v1143, 1.442695
    %v1148 = vpow.pop %v1147
    %v1149 = vmul.f32 %v1144, 1.442695
    %v1150 = vpow.pop %v1149
    %v1151 = vmul.f32 %v1145, 1.442695
    %v1152 = vpow.pop %v1151
    %v1153 = vmul.f32 %v1146, 1.442695
    %v1154 = vpow.pop %v1153
    %v1155 = vadd.f32 %v1148, 1.0
    %v1156 = vadd.f32 %v1150, 1.0
    %v1157 = vadd.f32 %v1152, 1.0
    %v1158 = vadd.f32 %v1154, 1.0
    %v1159 = vrcp.pop %v1155
    %v1160 = vmul.f32 1.0, %v1159
    %v1161 = vrcp.pop %v1156
    %v1162 = vmul.f32 1.0, %v1161
    %v1163 = vrcp.pop %v1157
    %v1164 = vmul.f32 1.0, %v1163
    %v1165 = vrcp.pop %v1158
    %v1166 = vmul.f32 1.0, %v1165
    %v1171 = vcombine.low %v1160, %v1162
    %v1172 = vcombine.low %v1164, %v1166
    %v1174 = vunpack.c.l.s4 1966171168
    %v1175 = vunpack.c.0.s8 %v1174
    %v1176 = vlaneseq
    %v1177 = vshrl.u32 %v1176, 7
    %v1178 = vsub.s32 %v1175, %v1177
    %v1179 = vrot.slane %v1171, %v1178
    %v1181 = vunpack.c.l.s4 1966171168
    %v1182 = vunpack.c.0.s8 %v1181
    %v1183 = vlaneseq
    %v1184 = vshrl.u32 %v1183, 7
    %v1185 = vsub.s32 %v1182, %v1184
    %v1186 = vrot.slane %v1172, %v1185
    %v1187 = vcombine.low %v1179, %v1186
    %v1189 = vunpack.c.l.s4 1966171168
    %v1190 = vunpack.c.0.s8 %v1189
    %v1191 = vlaneseq
    %v1192 = vshrl.u32 %v1191, 7
    %v1193 = vsub.s32 %v1190, %v1192
    %v1194 = vrot.slane %v1187, %v1193
    %v1196 = vlaneseq
    %vm1197 = vcmp.ge.s32.totalorder %v1196, 0
    %vm1198 = vcmp.lt.s32.totalorder %v1196, 512
    %vm1199 = vmand %vm1197, %vm1198
    %1200 = vst.msk [vmem:[#allocation2] sm:$0xf] %vm1199, %v1194
    // Predicated region
    $region10: #{tpu_custom_call.1} parent=1 // pred_check
      _
    $region11: #{tpu_custom_call.1} parent=1 // pred_check_branch
      %1202 = sbr.rel (0) target = $region13
    $region12: #{tpu_custom_call.1} parent=1 // pred_region
      %s1204 = ssub.s32 64, 64
      %1205 = vsyncadd [#allocation3], %s1204
      %s1207 = sshll.u32 [#allocation2], 4
      %s1208 = int_to_ptr.vmem [resolvable:$true] %s1207
      %1210 = dma.vmem_to_hbm [thread:$0]  %s1208, 64, %s2, [#allocation3]
    $region13: #{tpu_custom_call.1} parent=1 // pred_fallthru
      _
    // Predicated region
    $region14: #{tpu_custom_call.1} parent=1 // pred_check
      _
    $region15: #{tpu_custom_call.1} parent=1 // pred_check_branch
      %1212 = sbr.rel (0) target = $region17
    $region16: #{tpu_custom_call.1} parent=1 // pred_region
      %1213 = dma.done [#allocation3], 64
    $region17: #{tpu_custom_call.1} parent=1 // pred_fallthru
      _
    %1214 = vsyncpa [#allocation3], 1

</llo_original>
